<compile_context>
chip_gen: v6e
topology: v6e:2x2x1
jax: 0.10.0
libtpu: 0.0.40
codegen_flags: <defaults>
</compile_context>

<pallas_src>
import functools
import math

import jax
import jax.numpy as jnp
from jax import lax
from jax.experimental import pallas as pl
from jax.experimental.pallas import tpu as pltpu

ITERATION_NUM = 3
BN_EPS = 1e-5


def _softmax_over_k(logits):
    # logits: (K, T); softmax over the K (sublane) axis, f32.  Reciprocal-then-multiply:
    # T reciprocals + K*T VPU multiplies instead of K*T divides (frees the EUP slot for exp).
    m = jnp.max(logits, axis=0, keepdims=True)
    e = jnp.exp(logits - m)
    inv = 1.0 / jnp.sum(e, axis=0, keepdims=True)
    return e * inv


def ema_unit_kernel(mu0_ref, x_ref, w1_ref, b1_ref, w2s_ref, shift_ref, out_ref,
                    *, mxu_dtype):
    """Grid (B,): fully fused EMAUnit forward for one batch element.

    Channels-first throughout: activations are (C, HW) / (K, HW) tiles with the spatial
    axis on lanes.  conv1 is computed once; its MXU-dtype copy x1_m stays resident for all
    EM iterations and the reconstruction.
    """
    x = x_ref[0]                                                       # (C, HW) f32 (residual)
    x_m = x.astype(mxu_dtype)

    # conv1 (1x1, bias): x1[c,t] = sum_i w1[c,i] x[i,t] + b1[c].  Computed ONCE per batch.
    x1 = jnp.dot(w1_ref[...], x_m, preferred_element_type=jnp.float32) + b1_ref[...]
    x1_m = x1.astype(mxu_dtype)        # hoisted cast, reused by every dot below

    mu = mu0_ref[...]                                                  # (K, C) f32 (= mu^T)
    z_m = None
    for _ in range(ITERATION_NUM):     # static trip count -> fully unrolled, LLO-visible
        # E-step: z[k,t] = softmax_k( sum_c mu[k,c] * x1[c,t] )
        logits = jnp.dot(mu.astype(mxu_dtype), x1_m,
                         preferred_element_type=jnp.float32)           # (K, HW) f32
        z = _softmax_over_k(logits)
        z_m = z.astype(mxu_dtype)

        # M-step with the per-HW z normalization folded into the denominator
        # (mathematically identical to z_ = z / (1e-6 + sum_p z); mu = x1 @ z_):
        #   mu[k,c] = (sum_p z[k,p] x1[c,p]) / (1e-6 + sum_p z[k,p])
        den = jnp.sum(z, axis=1, keepdims=True)                        # (K, 1)
        num = lax.dot_general(                                         # (K, C) = z @ x1^T
            z_m, x1_m, (((1,), (1,)), ((), ())),                       # lane-contraction:
            preferred_element_type=jnp.float32)                        # q@k^T pattern, no vxpose
        mu = num * (1.0 / (1e-6 + den))
        # l2-normalize over channels (exact `1e-6 + sqrt(.)` placement of the reference).
        norm = jnp.sqrt(jnp.sum(mu * mu, axis=1, keepdims=True))
        mu = mu * (1.0 / (1e-6 + norm))

    # Reconstruction with the last z (computed from the pre-update mu) and the final mu:
    #   y[c,t] = sum_k mu[k,c] * z[k,t]
    # The implied transpose is only of the tiny (K, C) mu, once per batch element.
    y = lax.dot_general(mu.astype(mxu_dtype), z_m, (((0,), (0,)), ((), ())),
                        preferred_element_type=jnp.float32)            # (C, HW)
    y = jnp.maximum(y, 0.0)                                            # relu

    # conv2 (1x1, no bias) with BN(eval) scale pre-folded into the weights; BN shift,
    # residual add and final relu fused in the epilogue.
    y2 = jnp.dot(w2s_ref[...], y.astype(mxu_dtype),
                 preferred_element_type=jnp.float32)                   # (C, HW)
    out_ref[0] = jnp.maximum(y2 + shift_ref[...] + x, 0.0).astype(out_ref.dtype)


def ema_unit_forward(x_nchw, params, *, mxu_dtype=jnp.bfloat16, vmem_limit_bytes=None):
    b, c, h, w = x_nchw.shape
    hw = h * w
    k = params['mu'].shape[1]

    # NCHW kept as-is; only a free reshape (no HBM transpose passes in the wrapper).
    x_flat = x_nchw.reshape(b, c, hw).astype(jnp.float32)

    # One-time (tiny) parameter prep, hoisted out of the kernel:
    mu0_t = jnp.transpose(params['mu']).astype(jnp.float32)            # (K, C) = mu^T
    w1m = params['w1'].astype(mxu_dtype)                               # (C, C) native [out,in]
    b1c = params['b1'].reshape(c, 1).astype(jnp.float32)               # (C, 1)
    # BN(eval) -> per-channel scale/shift; scale folded into conv2 weights.
    scale_v = params['gamma'] / jnp.sqrt(params['var'] + BN_EPS)
    shift_v = params['beta'] - params['mean'] * scale_v
    w2s = (scale_v[:, None] * params['w2']).astype(mxu_dtype)          # (C, C)
    shift = shift_v.reshape(c, 1).astype(jnp.float32)

    def rep(shape):
        return pl.BlockSpec(shape, lambda ib: (0,) * len(shape))

    # Rough per-step VMEM footprint; bump the scoped limit only if the default (16/32 MiB)
    # would be too small (never triggers at the test shapes).
    mxu_bytes = jnp.dtype(mxu_dtype).itemsize
    est = (2 * 4 * c * hw                     # x block, double-buffered f32
           + 2 * 4 * c * hw                   # out block, double-buffered f32
           + (4 + mxu_bytes) * c * hw         # x1 (transient f32) + resident x1_m
           + (4 + mxu_bytes) * k * hw         # z + z_m
           + 2 * mxu_bytes * c * c            # w1, w2_scaled
           + 4 * (k * c + 2 * c))             # mu0^T, b1, shift
    cp_kwargs = dict(dimension_semantics=("parallel",))
    if vmem_limit_bytes is None and est > (16 << 20):
        vmem_limit_bytes = min(int(est) + (8 << 20), 120 << 20)
    if vmem_limit_bytes is not None:
        cp_kwargs['vmem_limit_bytes'] = int(vmem_limit_bytes)

    cost = pl.CostEstimate(
        flops=int(b * (4 * c * c * hw + (4 * ITERATION_NUM + 2) * k * c * hw)),
        transcendentals=int(b * ITERATION_NUM * k * hw),
        bytes_accessed=int(4 * 2 * b * c * hw + mxu_bytes * 2 * c * c
                           + 4 * (k * c + 2 * c)),
    )

    out_flat = pl.pallas_call(
        functools.partial(ema_unit_kernel, mxu_dtype=mxu_dtype),
        out_shape=jax.ShapeDtypeStruct((b, c, hw), jnp.float32),
        grid=(b,),
        in_specs=[
            rep((k, c)),                                               # mu0^T
            pl.BlockSpec((1, c, hw), lambda ib: (ib, 0, 0)),           # x (full (C,HW) per batch)
            rep((c, c)),                                               # conv1 weight
            rep((c, 1)),                                               # conv1 bias
            rep((c, c)),                                               # conv2 weight * BN scale
            rep((c, 1)),                                               # BN shift
        ],
        out_specs=pl.BlockSpec((1, c, hw), lambda ib: (ib, 0, 0)),
        compiler_params=pltpu.CompilerParams(**cp_kwargs),
        cost_estimate=cost,
    )(mu0_t, x_flat, w1m, b1c, w2s, shift)

    return out_flat.reshape(b, c, h, w)


def ema_unit_reference(x_nchw, p):
    """Pure-JAX reference mirroring the PyTorch forward (inference, f32)."""
    b, c, h, w = x_nchw.shape
    hw = h * w
    k = p['mu'].shape[1]
    x1 = jnp.einsum('oi,bihw->bohw', p['w1'], x_nchw) + p['b1'].reshape(1, c, 1, 1)
    xf = x1.reshape(b, c, hw)
    mu = jnp.broadcast_to(p['mu'], (b, c, k))
    z = None
    for _ in range(ITERATION_NUM):
        z = jnp.einsum('bcp,bck->bpk', xf, mu)
        z = jax.nn.softmax(z, axis=2)
        z_ = z / (1e-6 + jnp.sum(z, axis=1, keepdims=True))
        mu = jnp.einsum('bcp,bpk->bck', xf, z_)
        mu = mu / (1e-6 + jnp.linalg.norm(mu, axis=1, keepdims=True))
    y = jnp.einsum('bck,bpk->bcp', mu, z).reshape(b, c, h, w)
    y = jnp.maximum(y, 0.0)
    y = jnp.einsum('oi,bihw->bohw', p['w2'], y)
    y = ((y - p['mean'].reshape(1, c, 1, 1))
         * p['gamma'].reshape(1, c, 1, 1)
         / jnp.sqrt(p['var'].reshape(1, c, 1, 1) + BN_EPS)
         + p['beta'].reshape(1, c, 1, 1))
    return jnp.maximum(y + x_nchw, 0.0)


def init_params(key, c, k):
    keys = jax.random.split(key, 6)
    # mu ~ N(0, sqrt(2/k)), l2-normalized over the channel dim (as in the module init).
    mu = jax.random.normal(keys[0], (c, k), dtype=jnp.float32) * math.sqrt(2.0 / k)
    mu = mu / (1e-6 + jnp.linalg.norm(mu, axis=0, keepdims=True))
    # c2_msra_fill: kaiming_normal fan_out relu -> std = sqrt(2 / fan_out), bias = 0.
    w1 = jax.random.normal(keys[1], (c, c), dtype=jnp.float32) * math.sqrt(2.0 / c)
    b1 = jnp.zeros((c,), dtype=jnp.float32)
    w2 = jax.random.normal(keys[2], (c, c), dtype=jnp.float32) * math.sqrt(2.0 / c)
    # Non-trivial BN(eval) running stats so the folded scale/shift path is exercised.
    gamma = 1.0 + 0.1 * jax.random.normal(keys[3], (c,), dtype=jnp.float32)
    beta = 0.1 * jax.random.normal(keys[4], (c,), dtype=jnp.float32)
    mean = 0.1 * jax.random.normal(keys[5], (c,), dtype=jnp.float32)
    var = jnp.linspace(0.5, 1.5, c, dtype=jnp.float32)
    return dict(mu=mu, w1=w1, b1=b1, w2=w2, gamma=gamma, beta=beta, mean=mean, var=var)


if __name__ == "__main__":
    B, C, H, W, K = 2, 4, 16, 16, 8
    key = jax.random.PRNGKey(0)
    k_x, k_p = jax.random.split(key)
    x = jax.random.normal(k_x, (B, C, H, W), dtype=jnp.float32)
    params = init_params(k_p, C, K)

    ref = jax.block_until_ready(ema_unit_reference(x, params))

    # Exact-precision path (f32 MXU operands).
    out_f32 = jax.block_until_ready(ema_unit_forward(x, params, mxu_dtype=jnp.float32))
    assert out_f32.shape == (B, C, H, W)
    assert bool(jnp.all(jnp.isfinite(out_f32)))
    # Tolerance leaves headroom for TPU default matmul-precision (bf16-pass) differences
    # between the kernel's mathematically-exact refactored formulation and the reference.
    assert jnp.allclose(out_f32, ref, atol=2e-2, rtol=2e-2), (
        float(jnp.max(jnp.abs(out_f32 - ref))))

    # Fast path recommended for v6e/v7x: bf16 MXU operands, f32 accumulation/elementwise.
    out_bf16 = jax.block_until_ready(ema_unit_forward(x, params, mxu_dtype=jnp.bfloat16))
    assert out_bf16.shape == (B, C, H, W)
    assert jnp.allclose(out_bf16, ref, atol=1e-1, rtol=1e-1), (
        float(jnp.max(jnp.abs(out_bf16 - ref))))

    print("KERNEL_OK")
</pallas_src>

<mosaic_0001>
module attributes {stable_mosaic.version = 11 : i64} {
  func.func @ema_unit_kernel(%arg0: i32, %arg1: memref<8x4xf32, #tpu.memory_space<vmem>>, %arg2: memref<1x4x256xf32, #tpu.memory_space<vmem>>, %arg3: memref<4x4xf32, #tpu.memory_space<vmem>>, %arg4: memref<4x1xf32, #tpu.memory_space<vmem>>, %arg5: memref<4x4xf32, #tpu.memory_space<vmem>>, %arg6: memref<4x1xf32, #tpu.memory_space<vmem>>, %arg7: memref<1x4x256xf32, #tpu.memory_space<vmem>>) attributes {dimension_semantics = [#tpu.dimension_semantics<parallel>], iteration_bounds = array<i64: 2>, scalar_prefetch = 0 : i64, scratch_operands = 0 : i64, tpu.core_type = #tpu.core_type<tc>, window_params = [{pipeline_mode = #tpu.pipeline_mode<synchronous>, transform_indices = @transform_0, window_bounds = array<i64: 8, 4>}, {transform_indices = @transform_1, window_bounds = array<i64: 1, 4, 256>}, {pipeline_mode = #tpu.pipeline_mode<synchronous>, transform_indices = @transform_2, window_bounds = array<i64: 4, 4>}, {pipeline_mode = #tpu.pipeline_mode<synchronous>, transform_indices = @transform_3, window_bounds = array<i64: 4, 1>}, {pipeline_mode = #tpu.pipeline_mode<synchronous>, transform_indices = @transform_4, window_bounds = array<i64: 4, 4>}, {pipeline_mode = #tpu.pipeline_mode<synchronous>, transform_indices = @transform_5, window_bounds = array<i64: 4, 1>}, {transform_indices = @transform_6, window_bounds = array<i64: 1, 4, 256>}]} {
    %c0 = arith.constant 0 : index
    %c0_0 = arith.constant 0 : index
    %c0_1 = arith.constant 0 : index
    %0 = vector.load %arg2[%c0, %c0_0, %c0_1] : memref<1x4x256xf32, #tpu.memory_space<vmem>>, vector<1x4x256xf32>
    %1 = vector.shape_cast %0 : vector<1x4x256xf32> to vector<4x256xf32>
    %c0_2 = arith.constant 0 : index
    %c0_3 = arith.constant 0 : index
    %2 = vector.load %arg3[%c0_2, %c0_3] : memref<4x4xf32, #tpu.memory_space<vmem>>, vector<4x4xf32>
    %cst = arith.constant dense<0.000000e+00> : vector<4x256xf32>
    %3 = tpu.matmul %2, %1, %cst {dimension_numbers = #tpu.dot_dimension_numbers<[1], [0], [0], [1], [0, 0, 1, 1], [], []>} : vector<4x4xf32>, vector<4x256xf32>, vector<4x256xf32> -> vector<4x256xf32>
    %c0_4 = arith.constant 0 : index
    %c0_5 = arith.constant 0 : index
    %4 = vector.load %arg4[%c0_4, %c0_5] : memref<4x1xf32, #tpu.memory_space<vmem>>, vector<4x1xf32>
    %5 = vector.broadcast %4 : vector<4x1xf32> to vector<4x256xf32>
    %6 = arith.addf %3, %5 : vector<4x256xf32>
    %c0_6 = arith.constant 0 : index
    %c0_7 = arith.constant 0 : index
    %7 = vector.load %arg1[%c0_6, %c0_7] : memref<8x4xf32, #tpu.memory_space<vmem>>, vector<8x4xf32>
    %cst_8 = arith.constant dense<0.000000e+00> : vector<8x256xf32>
    %8 = tpu.matmul %7, %6, %cst_8 {dimension_numbers = #tpu.dot_dimension_numbers<[1], [0], [0], [1], [0, 0, 1, 1], [], []>} : vector<8x4xf32>, vector<4x256xf32>, vector<8x256xf32> -> vector<8x256xf32>
    %cst_9 = arith.constant dense<0xFF800000> : vector<256xf32>
    %9 = vector.multi_reduction <maximumf>, %8, %cst_9 [0] : vector<8x256xf32> to vector<256xf32>
    %10 = vector.shape_cast %9 : vector<256xf32> to vector<1x256xf32>
    %11 = vector.broadcast %10 : vector<1x256xf32> to vector<8x256xf32>
    %12 = arith.subf %8, %11 : vector<8x256xf32>
    %13 = math.exp %12 : vector<8x256xf32>
    %cst_10 = arith.constant dense<0.000000e+00> : vector<256xf32>
    %14 = vector.multi_reduction <add>, %13, %cst_10 [0] : vector<8x256xf32> to vector<256xf32>
    %15 = vector.shape_cast %14 : vector<256xf32> to vector<1x256xf32>
    %cst_11 = arith.constant 1.000000e+00 : f32
    %16 = vector.broadcast %cst_11 : f32 to vector<1x256xf32>
    %17 = arith.divf %16, %15 : vector<1x256xf32>
    %18 = vector.broadcast %17 : vector<1x256xf32> to vector<8x256xf32>
    %19 = arith.mulf %13, %18 : vector<8x256xf32>
    %cst_12 = arith.constant dense<0.000000e+00> : vector<8xf32>
    %20 = vector.multi_reduction <add>, %19, %cst_12 [1] : vector<8x256xf32> to vector<8xf32>
    %21 = vector.shape_cast %20 : vector<8xf32> to vector<8x1xf32>
    %cst_13 = arith.constant dense<0.000000e+00> : vector<8x4xf32>
    %22 = tpu.matmul %19, %6, %cst_13 {dimension_numbers = #tpu.dot_dimension_numbers<[1], [1], [0], [0], [0, 0, 1, 0], [], []>} : vector<8x256xf32>, vector<4x256xf32>, vector<8x4xf32> -> vector<8x4xf32>
    %cst_14 = arith.constant 9.99999997E-7 : f32
    %23 = vector.broadcast %cst_14 : f32 to vector<8x1xf32>
    %24 = arith.addf %23, %21 : vector<8x1xf32>
    %cst_15 = arith.constant 1.000000e+00 : f32
    %25 = vector.broadcast %cst_15 : f32 to vector<8x1xf32>
    %26 = arith.divf %25, %24 : vector<8x1xf32>
    %27 = vector.broadcast %26 : vector<8x1xf32> to vector<8x4xf32>
    %28 = arith.mulf %22, %27 : vector<8x4xf32>
    %29 = arith.mulf %28, %28 : vector<8x4xf32>
    %cst_16 = arith.constant dense<0.000000e+00> : vector<8xf32>
    %30 = vector.multi_reduction <add>, %29, %cst_16 [1] : vector<8x4xf32> to vector<8xf32>
    %31 = vector.shape_cast %30 : vector<8xf32> to vector<8x1xf32>
    %32 = math.sqrt %31 : vector<8x1xf32>
    %cst_17 = arith.constant 9.99999997E-7 : f32
    %33 = vector.broadcast %cst_17 : f32 to vector<8x1xf32>
    %34 = arith.addf %33, %32 : vector<8x1xf32>
    %cst_18 = arith.constant 1.000000e+00 : f32
    %35 = vector.broadcast %cst_18 : f32 to vector<8x1xf32>
    %36 = arith.divf %35, %34 : vector<8x1xf32>
    %37 = vector.broadcast %36 : vector<8x1xf32> to vector<8x4xf32>
    %38 = arith.mulf %28, %37 : vector<8x4xf32>
    %cst_19 = arith.constant dense<0.000000e+00> : vector<8x256xf32>
    %39 = tpu.matmul %38, %6, %cst_19 {dimension_numbers = #tpu.dot_dimension_numbers<[1], [0], [0], [1], [0, 0, 1, 1], [], []>} : vector<8x4xf32>, vector<4x256xf32>, vector<8x256xf32> -> vector<8x256xf32>
    %cst_20 = arith.constant dense<0xFF800000> : vector<256xf32>
    %40 = vector.multi_reduction <maximumf>, %39, %cst_20 [0] : vector<8x256xf32> to vector<256xf32>
    %41 = vector.shape_cast %40 : vector<256xf32> to vector<1x256xf32>
    %42 = vector.broadcast %41 : vector<1x256xf32> to vector<8x256xf32>
    %43 = arith.subf %39, %42 : vector<8x256xf32>
    %44 = math.exp %43 : vector<8x256xf32>
    %cst_21 = arith.constant dense<0.000000e+00> : vector<256xf32>
    %45 = vector.multi_reduction <add>, %44, %cst_21 [0] : vector<8x256xf32> to vector<256xf32>
    %46 = vector.shape_cast %45 : vector<256xf32> to vector<1x256xf32>
    %cst_22 = arith.constant 1.000000e+00 : f32
    %47 = vector.broadcast %cst_22 : f32 to vector<1x256xf32>
    %48 = arith.divf %47, %46 : vector<1x256xf32>
    %49 = vector.broadcast %48 : vector<1x256xf32> to vector<8x256xf32>
    %50 = arith.mulf %44, %49 : vector<8x256xf32>
    %cst_23 = arith.constant dense<0.000000e+00> : vector<8xf32>
    %51 = vector.multi_reduction <add>, %50, %cst_23 [1] : vector<8x256xf32> to vector<8xf32>
    %52 = vector.shape_cast %51 : vector<8xf32> to vector<8x1xf32>
    %cst_24 = arith.constant dense<0.000000e+00> : vector<8x4xf32>
    %53 = tpu.matmul %50, %6, %cst_24 {dimension_numbers = #tpu.dot_dimension_numbers<[1], [1], [0], [0], [0, 0, 1, 0], [], []>} : vector<8x256xf32>, vector<4x256xf32>, vector<8x4xf32> -> vector<8x4xf32>
    %cst_25 = arith.constant 9.99999997E-7 : f32
    %54 = vector.broadcast %cst_25 : f32 to vector<8x1xf32>
    %55 = arith.addf %54, %52 : vector<8x1xf32>
    %cst_26 = arith.constant 1.000000e+00 : f32
    %56 = vector.broadcast %cst_26 : f32 to vector<8x1xf32>
    %57 = arith.divf %56, %55 : vector<8x1xf32>
    %58 = vector.broadcast %57 : vector<8x1xf32> to vector<8x4xf32>
    %59 = arith.mulf %53, %58 : vector<8x4xf32>
    %60 = arith.mulf %59, %59 : vector<8x4xf32>
    %cst_27 = arith.constant dense<0.000000e+00> : vector<8xf32>
    %61 = vector.multi_reduction <add>, %60, %cst_27 [1] : vector<8x4xf32> to vector<8xf32>
    %62 = vector.shape_cast %61 : vector<8xf32> to vector<8x1xf32>
    %63 = math.sqrt %62 : vector<8x1xf32>
    %cst_28 = arith.constant 9.99999997E-7 : f32
    %64 = vector.broadcast %cst_28 : f32 to vector<8x1xf32>
    %65 = arith.addf %64, %63 : vector<8x1xf32>
    %cst_29 = arith.constant 1.000000e+00 : f32
    %66 = vector.broadcast %cst_29 : f32 to vector<8x1xf32>
    %67 = arith.divf %66, %65 : vector<8x1xf32>
    %68 = vector.broadcast %67 : vector<8x1xf32> to vector<8x4xf32>
    %69 = arith.mulf %59, %68 : vector<8x4xf32>
    %cst_30 = arith.constant dense<0.000000e+00> : vector<8x256xf32>
    %70 = tpu.matmul %69, %6, %cst_30 {dimension_numbers = #tpu.dot_dimension_numbers<[1], [0], [0], [1], [0, 0, 1, 1], [], []>} : vector<8x4xf32>, vector<4x256xf32>, vector<8x256xf32> -> vector<8x256xf32>
    %cst_31 = arith.constant dense<0xFF800000> : vector<256xf32>
    %71 = vector.multi_reduction <maximumf>, %70, %cst_31 [0] : vector<8x256xf32> to vector<256xf32>
    %72 = vector.shape_cast %71 : vector<256xf32> to vector<1x256xf32>
    %73 = vector.broadcast %72 : vector<1x256xf32> to vector<8x256xf32>
    %74 = arith.subf %70, %73 : vector<8x256xf32>
    %75 = math.exp %74 : vector<8x256xf32>
    %cst_32 = arith.constant dense<0.000000e+00> : vector<256xf32>
    %76 = vector.multi_reduction <add>, %75, %cst_32 [0] : vector<8x256xf32> to vector<256xf32>
    %77 = vector.shape_cast %76 : vector<256xf32> to vector<1x256xf32>
    %cst_33 = arith.constant 1.000000e+00 : f32
    %78 = vector.broadcast %cst_33 : f32 to vector<1x256xf32>
    %79 = arith.divf %78, %77 : vector<1x256xf32>
    %80 = vector.broadcast %79 : vector<1x256xf32> to vector<8x256xf32>
    %81 = arith.mulf %75, %80 : vector<8x256xf32>
    %cst_34 = arith.constant dense<0.000000e+00> : vector<8xf32>
    %82 = vector.multi_reduction <add>, %81, %cst_34 [1] : vector<8x256xf32> to vector<8xf32>
    %83 = vector.shape_cast %82 : vector<8xf32> to vector<8x1xf32>
    %cst_35 = arith.constant dense<0.000000e+00> : vector<8x4xf32>
    %84 = tpu.matmul %81, %6, %cst_35 {dimension_numbers = #tpu.dot_dimension_numbers<[1], [1], [0], [0], [0, 0, 1, 0], [], []>} : vector<8x256xf32>, vector<4x256xf32>, vector<8x4xf32> -> vector<8x4xf32>
    %cst_36 = arith.constant 9.99999997E-7 : f32
    %85 = vector.broadcast %cst_36 : f32 to vector<8x1xf32>
    %86 = arith.addf %85, %83 : vector<8x1xf32>
    %cst_37 = arith.constant 1.000000e+00 : f32
    %87 = vector.broadcast %cst_37 : f32 to vector<8x1xf32>
    %88 = arith.divf %87, %86 : vector<8x1xf32>
    %89 = vector.broadcast %88 : vector<8x1xf32> to vector<8x4xf32>
    %90 = arith.mulf %84, %89 : vector<8x4xf32>
    %91 = arith.mulf %90, %90 : vector<8x4xf32>
    %cst_38 = arith.constant dense<0.000000e+00> : vector<8xf32>
    %92 = vector.multi_reduction <add>, %91, %cst_38 [1] : vector<8x4xf32> to vector<8xf32>
    %93 = vector.shape_cast %92 : vector<8xf32> to vector<8x1xf32>
    %94 = math.sqrt %93 : vector<8x1xf32>
    %cst_39 = arith.constant 9.99999997E-7 : f32
    %95 = vector.broadcast %cst_39 : f32 to vector<8x1xf32>
    %96 = arith.addf %95, %94 : vector<8x1xf32>
    %cst_40 = arith.constant 1.000000e+00 : f32
    %97 = vector.broadcast %cst_40 : f32 to vector<8x1xf32>
    %98 = arith.divf %97, %96 : vector<8x1xf32>
    %99 = vector.broadcast %98 : vector<8x1xf32> to vector<8x4xf32>
    %100 = arith.mulf %90, %99 : vector<8x4xf32>
    %cst_41 = arith.constant dense<0.000000e+00> : vector<4x256xf32>
    %101 = tpu.matmul %100, %81, %cst_41 {dimension_numbers = #tpu.dot_dimension_numbers<[0], [0], [1], [1], [0, 1, 1, 1], [], []>} : vector<8x4xf32>, vector<8x256xf32>, vector<4x256xf32> -> vector<4x256xf32>
    %cst_42 = arith.constant 0.000000e+00 : f32
    %102 = vector.broadcast %cst_42 : f32 to vector<4x256xf32>
    %103 = arith.maximumf %101, %102 : vector<4x256xf32>
    %c0_43 = arith.constant 0 : index
    %c0_44 = arith.constant 0 : index
    %104 = vector.load %arg5[%c0_43, %c0_44] : memref<4x4xf32, #tpu.memory_space<vmem>>, vector<4x4xf32>
    %cst_45 = arith.constant dense<0.000000e+00> : vector<4x256xf32>
    %105 = tpu.matmul %104, %103, %cst_45 {dimension_numbers = #tpu.dot_dimension_numbers<[1], [0], [0], [1], [0, 0, 1, 1], [], []>} : vector<4x4xf32>, vector<4x256xf32>, vector<4x256xf32> -> vector<4x256xf32>
    %c0_46 = arith.constant 0 : index
    %c0_47 = arith.constant 0 : index
    %106 = vector.load %arg6[%c0_46, %c0_47] : memref<4x1xf32, #tpu.memory_space<vmem>>, vector<4x1xf32>
    %107 = vector.broadcast %106 : vector<4x1xf32> to vector<4x256xf32>
    %108 = arith.addf %105, %107 : vector<4x256xf32>
    %109 = arith.addf %108, %1 : vector<4x256xf32>
    %cst_48 = arith.constant 0.000000e+00 : f32
    %110 = vector.broadcast %cst_48 : f32 to vector<4x256xf32>
    %111 = arith.maximumf %109, %110 : vector<4x256xf32>
    %c0_49 = arith.constant 0 : index
    %c0_50 = arith.constant 0 : index
    %c0_51 = arith.constant 0 : index
    %112 = vector.load %arg7[%c0_49, %c0_50, %c0_51] : memref<1x4x256xf32, #tpu.memory_space<vmem>>, vector<1x4x256xf32>
    %113 = vector.shape_cast %112 : vector<1x4x256xf32> to vector<4x256xf32>
    %114 = vector.shape_cast %111 : vector<4x256xf32> to vector<1x4x256xf32>
    tpu.vector_store %arg7[%c0_49, %c0_50, %c0_51], %114 {strides = array<i32>} : memref<1x4x256xf32, #tpu.memory_space<vmem>>, vector<1x4x256xf32>,
    return
  }
  func.func @transform_0(%arg0: i32) -> (i32, i32) {
    %c0_i32 = arith.constant 0 : i32
    %c0_i32_0 = arith.constant 0 : i32
    %c0_i32_1 = arith.constant 0 : i32
    return %c0_i32, %c0_i32_0 : i32, i32
  }
  func.func @transform_1(%arg0: i32) -> (i32, i32, i32) {
    %c0_i32 = arith.constant 0 : i32
    %c0_i32_0 = arith.constant 0 : i32
    %c0_i32_1 = arith.constant 0 : i32
    return %arg0, %c0_i32, %c0_i32_0 : i32, i32, i32
  }
  func.func @transform_2(%arg0: i32) -> (i32, i32) {
    %c0_i32 = arith.constant 0 : i32
    %c0_i32_0 = arith.constant 0 : i32
    %c0_i32_1 = arith.constant 0 : i32
    return %c0_i32, %c0_i32_0 : i32, i32
  }
  func.func @transform_3(%arg0: i32) -> (i32, i32) {
    %c0_i32 = arith.constant 0 : i32
    %c0_i32_0 = arith.constant 0 : i32
    %c0_i32_1 = arith.constant 0 : i32
    return %c0_i32, %c0_i32_0 : i32, i32
  }
  func.func @transform_4(%arg0: i32) -> (i32, i32) {
    %c0_i32 = arith.constant 0 : i32
    %c0_i32_0 = arith.constant 0 : i32
    %c0_i32_1 = arith.constant 0 : i32
    return %c0_i32, %c0_i32_0 : i32, i32
  }
  func.func @transform_5(%arg0: i32) -> (i32, i32) {
    %c0_i32 = arith.constant 0 : i32
    %c0_i32_0 = arith.constant 0 : i32
    %c0_i32_1 = arith.constant 0 : i32
    return %c0_i32, %c0_i32_0 : i32, i32
  }
  func.func @transform_6(%arg0: i32) -> (i32, i32, i32) {
    %c0_i32 = arith.constant 0 : i32
    %c0_i32_0 = arith.constant 0 : i32
    %c0_i32_1 = arith.constant 0 : i32
    return %arg0, %c0_i32, %c0_i32_0 : i32, i32, i32
  }
}

</mosaic_0001>

<llo_original>
// kernel: tpu_custom_call.1
$region0: #{tpu_custom_call.1}
  #allocation0 [shape = 'u32[]', space=smem, size = 0x4, offset = 0x4, fixed_abs, tag = 'smem constant byte address 0x4 - core index']
  #allocation1 [shape = 'u32[144,128]{1,0:T(1,128)}', space=vmem, size = 0x12000, scoped, tag = 'internal scratch']
  %s0 = inlined_call_operand.vmem [shape: f32[8,4], index: 0, kind: input, shape index: {}]
  %s1 = inlined_call_operand.vmem [shape: f32[2,4,256], index: 1, kind: input, shape index: {}]
  %s2 = inlined_call_operand.vmem [shape: f32[4,4], index: 2, kind: input, shape index: {}]
  %s3 = inlined_call_operand.vmem [shape: f32[4,1], index: 3, kind: input, shape index: {}]
  %s4 = inlined_call_operand.vmem [shape: f32[4,4], index: 4, kind: input, shape index: {}]
  %s5 = inlined_call_operand.vmem [shape: f32[4,1], index: 5, kind: input, shape index: {}]
  %s6 = inlined_call_operand.hbm [shape: f32[2,4,256], index: 6, kind: output, shape index: {}]
  %s7 = sld [smem:[#allocation0]]
  $region57: #{tpu_custom_call.1} parent=0
    _
  %s9 = ssub.s32 1, %s7
  %s10 = scalar_select 0, %s9, %s7
  $region1: #{tpu_custom_call.1} parent=0
    #allocation2 [shape = 'u8[8192]{0}', space=vmem, size = 0x2000, scoped, tag = 'output window, operand 0']
    #allocation3 [shape = 's32[2]{0}', space=sflag, size = 0x8, scoped, tag = 'scoped memory for tpu_custom_call.1']
    %11 = vsyncpa [#allocation3], 0
    %s12 = scalar_lea.sflag [#allocation3], 1
    %13 = vsyncpa %s12, 0
    loop: start=0, step=1, limit=4
    $region2: #{tpu_custom_call.1} parent=1 // loop_pre_header
      _
    $region3: #{tpu_custom_call.1} parent=1 // loop_header
      %s15 = sphi 0, %s19
      %p16 = scmp.ge.s32.totalorder %s15, 4
      %s23 = sphi 0, %s23
      %s25 = sphi 0, %s23
      %s26 = sphi 0, %s25
      %s40 = sphi 0, %s26
      %s46 = sphi 0, %s48
      %s49 = sphi 0, %s46
      %s50 = sphi 0, %s49
      %s66 = sphi 0, %s50
      %s70 = sphi 0, %s70
      %s72 = sphi 0, %s70
      %s73 = sphi 0, %s72
      %s87 = sphi 0, %s73
      %s91 = sphi 0, %s91
      %s93 = sphi 0, %s91
      %s94 = sphi 0, %s93
      %s108 = sphi 0, %s94
      %s112 = sphi 0, %s112
      %s114 = sphi 0, %s112
      %s115 = sphi 0, %s114
      %s129 = sphi 0, %s115
      %s133 = sphi 0, %s133
      %s135 = sphi 0, %s133
      %s136 = sphi 0, %s135
      %s150 = sphi 0, %s136
      %s156 = sphi 0, %s158
      %s159 = sphi 0, %s156
      %s160 = sphi 0, %s159
      %s176 = sphi 0, %s160
    $region4: #{tpu_custom_call.1} parent=1 // loop_header_branch
      %18 = sbr.rel (%p16) target = $region8
    $region5: #{tpu_custom_call.1} parent=1 // loop_body
      %s20 = ssub.s32 %s15, 1
      %s21 = ssub.s32 %s15, 2
      %s22 = sadd.s32 %s15, 1
      %s24 = sadd.s32 %s23, 1
      %p27 = scmp.eq.s32.totalorder %s15, 1
      %p28 = scmp.ne.s32.totalorder %s23, %s25
      %p29 = scmp.eq.s32.totalorder %s15, 0
      %p30 = por %p28, %p29
      %p31 = scmp.ne.s32.totalorder %s23, %s25
      %p32 = scmp.eq.s32.totalorder %s20, 1
      %p33 = por %p31, %p32
      %p34 = scmp.ne.s32.totalorder %s25, %s26
      %p35 = scmp.eq.s32.totalorder %s20, 0
      %p36 = por %p34, %p35
      %p37 = scmp.ne.s32.totalorder %s25, %s26
      %p38 = scmp.eq.s32.totalorder %s21, 1
      %p39 = por %p37, %p38
      %p41 = scmp.ne.s32.totalorder %s26, %s40
      %p42 = scmp.eq.s32.totalorder %s21, 0
      %p43 = por %p41, %p42
      %s44 = ssub.s32 %s15, %s22
      %p45 = scmp.eq.s32.totalorder %s44, 0
      %s47 = sadd.s32 %s46, 1
      %s48 = scalar_select %p45, %s46, %s47
      %p51 = pneg %p45
      %p52 = scmp.eq.s32.totalorder %s15, 1
      %p53 = por %p51, %p52
      %p54 = scmp.ne.s32.totalorder %s46, %s49
      %p55 = scmp.eq.s32.totalorder %s15, 0
      %p56 = por %p54, %p55
      %p57 = scmp.ne.s32.totalorder %s46, %s49
      %p58 = scmp.eq.s32.totalorder %s20, 1
      %p59 = por %p57, %p58
      %p60 = scmp.ne.s32.totalorder %s49, %s50
      %p61 = scmp.eq.s32.totalorder %s20, 0
      %p62 = por %p60, %p61
      %p63 = scmp.ne.s32.totalorder %s49, %s50
      %p64 = scmp.eq.s32.totalorder %s21, 1
      %p65 = por %p63, %p64
      %p67 = scmp.ne.s32.totalorder %s50, %s66
      %p68 = scmp.eq.s32.totalorder %s21, 0
      %p69 = por %p67, %p68
      %s71 = sadd.s32 %s70, 1
      %p74 = scmp.eq.s32.totalorder %s15, 1
      %p75 = scmp.ne.s32.totalorder %s70, %s72
      %p76 = scmp.eq.s32.totalorder %s15, 0
      %p77 = por %p75, %p76
      %p78 = scmp.ne.s32.totalorder %s70, %s72
      %p79 = scmp.eq.s32.totalorder %s20, 1
      %p80 = por %p78, %p79
      %p81 = scmp.ne.s32.totalorder %s72, %s73
      %p82 = scmp.eq.s32.totalorder %s20, 0
      %p83 = por %p81, %p82
      %p84 = scmp.ne.s32.totalorder %s72, %s73
      %p85 = scmp.eq.s32.totalorder %s21, 1
      %p86 = por %p84, %p85
      %p88 = scmp.ne.s32.totalorder %s73, %s87
      %p89 = scmp.eq.s32.totalorder %s21, 0
      %p90 = por %p88, %p89
      %s92 = sadd.s32 %s91, 1
      %p95 = scmp.eq.s32.totalorder %s15, 1
      %p96 = scmp.ne.s32.totalorder %s91, %s93
      %p97 = scmp.eq.s32.totalorder %s15, 0
      %p98 = por %p96, %p97
      %p99 = scmp.ne.s32.totalorder %s91, %s93
      %p100 = scmp.eq.s32.totalorder %s20, 1
      %p101 = por %p99, %p100
      %p102 = scmp.ne.s32.totalorder %s93, %s94
      %p103 = scmp.eq.s32.totalorder %s20, 0
      %p104 = por %p102, %p103
      %p105 = scmp.ne.s32.totalorder %s93, %s94
      %p106 = scmp.eq.s32.totalorder %s21, 1
      %p107 = por %p105, %p106
      %p109 = scmp.ne.s32.totalorder %s94, %s108
      %p110 = scmp.eq.s32.totalorder %s21, 0
      %p111 = por %p109, %p110
      %s113 = sadd.s32 %s112, 1
      %p116 = scmp.eq.s32.totalorder %s15, 1
      %p117 = scmp.ne.s32.totalorder %s112, %s114
      %p118 = scmp.eq.s32.totalorder %s15, 0
      %p119 = por %p117, %p118
      %p120 = scmp.ne.s32.totalorder %s112, %s114
      %p121 = scmp.eq.s32.totalorder %s20, 1
      %p122 = por %p120, %p121
      %p123 = scmp.ne.s32.totalorder %s114, %s115
      %p124 = scmp.eq.s32.totalorder %s20, 0
      %p125 = por %p123, %p124
      %p126 = scmp.ne.s32.totalorder %s114, %s115
      %p127 = scmp.eq.s32.totalorder %s21, 1
      %p128 = por %p126, %p127
      %p130 = scmp.ne.s32.totalorder %s115, %s129
      %p131 = scmp.eq.s32.totalorder %s21, 0
      %p132 = por %p130, %p131
      %s134 = sadd.s32 %s133, 1
      %p137 = scmp.eq.s32.totalorder %s15, 1
      %p138 = scmp.ne.s32.totalorder %s133, %s135
      %p139 = scmp.eq.s32.totalorder %s15, 0
      %p140 = por %p138, %p139
      %p141 = scmp.ne.s32.totalorder %s133, %s135
      %p142 = scmp.eq.s32.totalorder %s20, 1
      %p143 = por %p141, %p142
      %p144 = scmp.ne.s32.totalorder %s135, %s136
      %p145 = scmp.eq.s32.totalorder %s20, 0
      %p146 = por %p144, %p145
      %p147 = scmp.ne.s32.totalorder %s135, %s136
      %p148 = scmp.eq.s32.totalorder %s21, 1
      %p149 = por %p147, %p148
      %p151 = scmp.ne.s32.totalorder %s136, %s150
      %p152 = scmp.eq.s32.totalorder %s21, 0
      %p153 = por %p151, %p152
      %s154 = ssub.s32 %s15, %s22
      %p155 = scmp.eq.s32.totalorder %s154, 0
      %s157 = sadd.s32 %s156, 1
      %s158 = scalar_select %p155, %s156, %s157
      %p161 = pneg %p155
      %p162 = scmp.eq.s32.totalorder %s15, 1
      %p163 = por %p161, %p162
      %p164 = scmp.ne.s32.totalorder %s156, %s159
      %p165 = scmp.eq.s32.totalorder %s15, 0
      %p166 = por %p164, %p165
      %p167 = scmp.ne.s32.totalorder %s156, %s159
      %p168 = scmp.eq.s32.totalorder %s20, 1
      %p169 = por %p167, %p168
      %p170 = scmp.ne.s32.totalorder %s159, %s160
      %p171 = scmp.eq.s32.totalorder %s20, 0
      %p172 = por %p170, %p171
      %p173 = scmp.ne.s32.totalorder %s159, %s160
      %p174 = scmp.eq.s32.totalorder %s21, 1
      %p175 = por %p173, %p174
      %p177 = scmp.ne.s32.totalorder %s160, %s176
      %p178 = scmp.eq.s32.totalorder %s21, 0
      %p179 = por %p177, %p178
      %p180 = scmp.le.s32.totalorder 1, %s15
      %p181 = scmp.lt.s32.totalorder %s15, 3
      %p182 = pnand %p180, %p181
      %p183 = pneg %p182
      // Predicated region
      $region9: #{tpu_custom_call.1} parent=5 // pred_check
        _
      $region10: #{tpu_custom_call.1} parent=5 // pred_check_branch
        %185 = sbr.rel (%p182) target = $region12
      $region11: #{tpu_custom_call.1} parent=5 // pred_region
        %s186 = ssub.s32 %s15, 1
        // Predicated region
        $region13: #{tpu_custom_call.1} parent=11 // pred_check
          %p187 = pneg %p36
        $region14: #{tpu_custom_call.1} parent=11 // pred_check_branch
          %189 = sbr.rel (%p187) target = $region16
        $region15: #{tpu_custom_call.1} parent=11 // pred_region
          _
        $region16: #{tpu_custom_call.1} parent=11 // pred_fallthru
          _
        // Predicated region
        $region17: #{tpu_custom_call.1} parent=11 // pred_check
          %p190 = pneg %p83
        $region18: #{tpu_custom_call.1} parent=11 // pred_check_branch
          %192 = sbr.rel (%p190) target = $region20
        $region19: #{tpu_custom_call.1} parent=11 // pred_region
          _
        $region20: #{tpu_custom_call.1} parent=11 // pred_fallthru
          _
        // Predicated region
        $region21: #{tpu_custom_call.1} parent=11 // pred_check
          %p193 = pneg %p104
        $region22: #{tpu_custom_call.1} parent=11 // pred_check_branch
          %195 = sbr.rel (%p193) target = $region24
        $region23: #{tpu_custom_call.1} parent=11 // pred_region
          _
        $region24: #{tpu_custom_call.1} parent=11 // pred_fallthru
          _
        // Predicated region
        $region25: #{tpu_custom_call.1} parent=11 // pred_check
          %p196 = pneg %p125
        $region26: #{tpu_custom_call.1} parent=11 // pred_check_branch
          %198 = sbr.rel (%p196) target = $region28
        $region27: #{tpu_custom_call.1} parent=11 // pred_region
          _
        $region28: #{tpu_custom_call.1} parent=11 // pred_fallthru
          _
        // Predicated region
        $region29: #{tpu_custom_call.1} parent=11 // pred_check
          %p199 = pneg %p146
        $region30: #{tpu_custom_call.1} parent=11 // pred_check_branch
          %201 = sbr.rel (%p199) target = $region32
        $region31: #{tpu_custom_call.1} parent=11 // pred_region
          _
        $region32: #{tpu_custom_call.1} parent=11 // pred_fallthru
          _
      $region12: #{tpu_custom_call.1} parent=5 // pred_fallthru
        _
      %p202 = scmp.lt.s32.totalorder %s15, 2
      // Predicated region
      $region33: #{tpu_custom_call.1} parent=5 // pred_check
        %p203 = pneg %p202
      $region34: #{tpu_custom_call.1} parent=5 // pred_check_branch
        %205 = sbr.rel (%p203) target = $region36
      $region35: #{tpu_custom_call.1} parent=5 // pred_region
        // Predicated region
        $region37: #{tpu_custom_call.1} parent=35 // pred_check
          %p206 = pneg %p56
        $region38: #{tpu_custom_call.1} parent=35 // pred_check_branch
          %208 = sbr.rel (%p206) target = $region40
        $region39: #{tpu_custom_call.1} parent=35 // pred_region
          %p209 = scmp.lt.s32.totalorder %s15, 1
          %s210 = scalar_select %p209, %s15, 1
          %s211 = smul.addr %s210, 2
          %s212 = smul.addr %s211, 4
          %s213 = scalar_lea.vmem %s1, %s212
        $region40: #{tpu_custom_call.1} parent=35 // pred_fallthru
          _
      $region36: #{tpu_custom_call.1} parent=5 // pred_fallthru
        _
      %p214 = scmp.le.s32.totalorder 1, %s15
      %p215 = scmp.lt.s32.totalorder %s15, 3
      %p216 = pnand %p214, %p215
      %p217 = pneg %p216
      // Predicated region
      $region41: #{tpu_custom_call.1} parent=5 // pred_check
        _
      $region42: #{tpu_custom_call.1} parent=5 // pred_check_branch
        %219 = sbr.rel (%p216) target = $region44
      $region43: #{tpu_custom_call.1} parent=5 // pred_region
        %s220 = ssub.s32 %s15, 1
        %p221 = pneg %p36
        %p222 = pneg %p33
        %p223 = scmp.lt.s32.totalorder %s20, 1
        %s224 = scalar_select %p223, %s20, 1
        %s225 = smul.addr %s224, 2
        %s226 = smul.addr %s225, 4
        %s227 = scalar_lea.vmem %s1, %s226
        %p228 = pneg %p62
        %p229 = pneg %p59
        %p230 = pneg %p83
        %p231 = pneg %p80
        %p232 = pneg %p104
        %p233 = pneg %p101
        %p234 = pneg %p125
        %p235 = pneg %p122
        %p236 = pneg %p146
        %p237 = pneg %p143
        %p238 = pneg %p172
        %p239 = pneg %p169
        %s240 = sand.u32 %s159, 1
        %s241 = scalar_lea.sflag [#allocation3], %s240
        %s242 = sand.u32 %s159, 1
        %s243 = smul.addr %s242, 8
        %s244 = scalar_lea.vmem [#allocation2], %s243
        %p245 = scmp.lt.s32.totalorder %s20, 1
        %s246 = scalar_select %p245, %s20, 1
        %s247 = smul.addr %s246, 2
        %s248 = smul.addr %s247, 4
        %s249 = scalar_lea.vmem %s1, %s248
        %v250 = vld [vmem:[%s249] sm:$0xff]
        %v251 = vld [vmem:[%s2] sm:$0xf]
        %v252 = vld [vmem:[%s3] sm:$0xf]
        %254 = vset.pattern.permute.xlu0 0
        %255 = vperm.xlu0 %254, %v252
        %v256 = vpop.permute.xlu0 %255
        %v259 = vcombine.high %v250, %v250
        %vm260 = vcmask 31744
        %v262 = vsel %vm260, %v251, 0
        %vm264 = vcmask 1043456
        %v265 = vsel %vm264, %v250, 0
        %v267 = vsel %vm264, %v259, 0
        %269 = vmatprep.subr.mxu0 0.0
        %270 = vmatpush1.msra.mxu0 0.0
        %271 = vmatprep.subr.mxu0 0.0
        %272 = vmatpush1.msra.mxu0 0.0
        %273 = vmatprep.subr.mxu0 0.0
        %274 = vmatpush1.msra.mxu0 0.0
        %275 = vmatprep.subr.mxu0 0.0
        %276 = vmatpush1.msra.mxu0 0.0
        %277 = vmatprep.subr.mxu0 0.0
        %278 = vmatpush1.msra.mxu0 0.0
        %279 = vmatprep.subr.mxu0 0.0
        %280 = vmatpush1.msra.mxu0 0.0
        %281 = vmatprep.subr.mxu0 0.0
        %282 = vmatpush1.msra.mxu0 0.0
        %283 = vmatprep.subr.mxu0 0.0
        %284 = vmatpush1.msra.mxu0 0.0
        %285 = vmatprep.subr.mxu0 0.0
        %286 = vmatpush1.msra.mxu0 0.0
        %287 = vmatprep.subr.mxu0 0.0
        %288 = vmatpush1.msra.mxu0 0.0
        %289 = vmatprep.subr.mxu0 0.0
        %290 = vmatpush1.msra.mxu0 0.0
        %291 = vmatprep.subr.mxu0 0.0
        %292 = vmatpush1.msra.mxu0 0.0
        %293 = vmatprep.subr.mxu0 0.0
        %294 = vmatpush1.msra.mxu0 0.0
        %295 = vmatprep.subr.mxu0 0.0
        %296 = vmatpush1.msra.mxu0 0.0
        %297 = vmatprep.subr.mxu0 0.0
        %298 = vmatpush1.msra.mxu0 0.0
        %299 = vmatprep.subr.mxu0 %v267
        %300 = vmatpush1.msra.mxu0 %v265
        %301 = vmatprep.subr.mxu0 0.0
        %302 = vmatpush2.msra.mxu0 0.0
        %303 = vmatprep.subr.mxu0 0.0
        %304 = vmatpush2.msra.mxu0 0.0
        %305 = vmatprep.subr.mxu0 0.0
        %306 = vmatpush2.msra.mxu0 0.0
        %307 = vmatprep.subr.mxu0 0.0
        %308 = vmatpush2.msra.mxu0 0.0
        %309 = vmatprep.subr.mxu0 0.0
        %310 = vmatpush2.msra.mxu0 0.0
        %311 = vmatprep.subr.mxu0 0.0
        %312 = vmatpush2.msra.mxu0 0.0
        %313 = vmatprep.subr.mxu0 0.0
        %314 = vmatpush2.msra.mxu0 0.0
        %315 = vmatprep.subr.mxu0 0.0
        %316 = vmatpush2.msra.mxu0 0.0
        %317 = vmatprep.subr.mxu0 0.0
        %318 = vmatpush2.msra.mxu0 0.0
        %319 = vmatprep.subr.mxu0 0.0
        %320 = vmatpush2.msra.mxu0 0.0
        %321 = vmatprep.subr.mxu0 0.0
        %322 = vmatpush2.msra.mxu0 0.0
        %323 = vmatprep.subr.mxu0 0.0
        %324 = vmatpush2.msra.mxu0 0.0
        %325 = vmatprep.subr.mxu0 0.0
        %326 = vmatpush2.msra.mxu0 0.0
        %327 = vmatprep.subr.mxu0 0.0
        %328 = vmatpush2.msra.mxu0 0.0
        %329 = vmatprep.subr.mxu0 0.0
        %330 = vmatpush2.msra.mxu0 0.0
        %331 = vmatprep.subr.mxu0 0.0
        %332 = vmatpush2.msra.mxu0 0.0
        %333 = vmatprep.mubr.f32.mxu0 0.0
        %334 = vmatmul.mubr.f32.gmra.mxu0 %v262
        %v335 = vpop.f32.mrf.mxu0
        %v336 = vadd.f32 %v256, %v335
        %v337 = vpop.f32.mrf.mxu0
        %v338 = vadd.f32 %v256, %v337
        %339 = vdwg.mxu0
        %v340 = vld [vmem:[%s0] sm:$0xff]
        %v342 = vsel %vm260, %v340, 0
        %v345 = vsel %vm264, %v336, 0
        %v348 = vsel %vm264, %v338, 0
        %350 = vmatprep.subr.mxu0 0.0
        %351 = vmatpush1.msra.mxu0 0.0
        %352 = vmatprep.subr.mxu0 0.0
        %353 = vmatpush1.msra.mxu0 0.0
        %354 = vmatprep.subr.mxu0 0.0
        %355 = vmatpush1.msra.mxu0 0.0
        %356 = vmatprep.subr.mxu0 0.0
        %357 = vmatpush1.msra.mxu0 0.0
        %358 = vmatprep.subr.mxu0 0.0
        %359 = vmatpush1.msra.mxu0 0.0
        %360 = vmatprep.subr.mxu0 0.0
        %361 = vmatpush1.msra.mxu0 0.0
        %362 = vmatprep.subr.mxu0 0.0
        %363 = vmatpush1.msra.mxu0 0.0
        %364 = vmatprep.subr.mxu0 0.0
        %365 = vmatpush1.msra.mxu0 0.0
        %366 = vmatprep.subr.mxu0 0.0
        %367 = vmatpush1.msra.mxu0 0.0
        %368 = vmatprep.subr.mxu0 0.0
        %369 = vmatpush1.msra.mxu0 0.0
        %370 = vmatprep.subr.mxu0 0.0
        %371 = vmatpush1.msra.mxu0 0.0
        %372 = vmatprep.subr.mxu0 0.0
        %373 = vmatpush1.msra.mxu0 0.0
        %374 = vmatprep.subr.mxu0 0.0
        %375 = vmatpush1.msra.mxu0 0.0
        %376 = vmatprep.subr.mxu0 0.0
        %377 = vmatpush1.msra.mxu0 0.0
        %378 = vmatprep.subr.mxu0 0.0
        %379 = vmatpush1.msra.mxu0 0.0
        %380 = vmatprep.subr.mxu0 %v348
        %381 = vmatpush1.msra.mxu0 %v345
        %382 = vmatprep.subr.mxu0 0.0
        %383 = vmatpush2.msra.mxu0 0.0
        %384 = vmatprep.subr.mxu0 0.0
        %385 = vmatpush2.msra.mxu0 0.0
        %386 = vmatprep.subr.mxu0 0.0
        %387 = vmatpush2.msra.mxu0 0.0
        %388 = vmatprep.subr.mxu0 0.0
        %389 = vmatpush2.msra.mxu0 0.0
        %390 = vmatprep.subr.mxu0 0.0
        %391 = vmatpush2.msra.mxu0 0.0
        %392 = vmatprep.subr.mxu0 0.0
        %393 = vmatpush2.msra.mxu0 0.0
        %394 = vmatprep.subr.mxu0 0.0
        %395 = vmatpush2.msra.mxu0 0.0
        %396 = vmatprep.subr.mxu0 0.0
        %397 = vmatpush2.msra.mxu0 0.0
        %398 = vmatprep.subr.mxu0 0.0
        %399 = vmatpush2.msra.mxu0 0.0
        %400 = vmatprep.subr.mxu0 0.0
        %401 = vmatpush2.msra.mxu0 0.0
        %402 = vmatprep.subr.mxu0 0.0
        %403 = vmatpush2.msra.mxu0 0.0
        %404 = vmatprep.subr.mxu0 0.0
        %405 = vmatpush2.msra.mxu0 0.0
        %406 = vmatprep.subr.mxu0 0.0
        %407 = vmatpush2.msra.mxu0 0.0
        %408 = vmatprep.subr.mxu0 0.0
        %409 = vmatpush2.msra.mxu0 0.0
        %410 = vmatprep.subr.mxu0 0.0
        %411 = vmatpush2.msra.mxu0 0.0
        %412 = vmatprep.subr.mxu0 0.0
        %413 = vmatpush2.msra.mxu0 0.0
        %414 = vmatprep.mubr.f32.mxu0 0.0
        %415 = vmatmul.mubr.f32.gmra.mxu0 %v342
        %v416 = vpop.f32.mrf.mxu0
        %v417 = vadd.f32 0.0, %v416
        %v418 = vpop.f32.mrf.mxu0
        %v419 = vadd.f32 0.0, %v418
        %420 = vdwg.mxu0
        %v421 = vrot.slane %v417, 4
        %v422 = vmax.f32 %v417, %v421
        %v423 = vrot.slane %v422, 2
        %v424 = vmax.f32 %v422, %v423
        %v425 = vrot.slane %v424, 1
        %v426 = vmax.f32 %v424, %v425
        %v427 = vrot.slane %v419, 4
        %v428 = vmax.f32 %v419, %v427
        %v429 = vrot.slane %v428, 2
        %v430 = vmax.f32 %v428, %v429
        %v431 = vrot.slane %v430, 1
        %v432 = vmax.f32 %v430, %v431
        %v433 = vsub.f32 %v417, %v426
        %v434 = vsub.f32 %v419, %v432
        %v435 = vmul.f32 %v433, 1.442695
        %v436 = vpow.pop %v435
        %v437 = vmul.f32 %v434, 1.442695
        %v438 = vpow.pop %v437
        %v439 = vrot.slane %v436, 4
        %v440 = vadd.f32 %v436, %v439
        %v441 = vrot.slane %v440, 2
        %v442 = vadd.f32 %v440, %v441
        %v443 = vrot.slane %v442, 1
        %v444 = vadd.f32 %v442, %v443
        %v445 = vrot.slane %v438, 4
        %v446 = vadd.f32 %v438, %v445
        %v447 = vrot.slane %v446, 2
        %v448 = vadd.f32 %v446, %v447
        %v449 = vrot.slane %v448, 1
        %v450 = vadd.f32 %v448, %v449
        %v451 = vrcp.pop %v444
        %v452 = vmul.f32 1.0, %v451
        %v453 = vrcp.pop %v450
        %v454 = vmul.f32 1.0, %v453
        %v455 = vmul.f32 %v436, %v452
        %v456 = vmul.f32 %v438, %v454
        %v457 = vadd.f32 %v455, %v456
        %458 = vadd.xlane.f32.xlu0 %v457
        %v459 = vpop.xlane.xlu0 %458
        %460 = vmatprep.subr.mxu0 0.0
        %461 = vmatpush1.xpose.msra.mxu0 0.0
        %462 = vmatprep.subr.mxu0 0.0
        %463 = vmatpush1.xpose.msra.mxu0 0.0
        %464 = vmatprep.subr.mxu0 0.0
        %465 = vmatpush1.xpose.msra.mxu0 0.0
        %466 = vmatprep.subr.mxu0 0.0
        %467 = vmatpush1.xpose.msra.mxu0 0.0
        %468 = vmatprep.subr.mxu0 0.0
        %469 = vmatpush1.xpose.msra.mxu0 0.0
        %470 = vmatprep.subr.mxu0 0.0
        %471 = vmatpush1.xpose.msra.mxu0 0.0
        %472 = vmatprep.subr.mxu0 0.0
        %473 = vmatpush1.xpose.msra.mxu0 0.0
        %474 = vmatprep.subr.mxu0 0.0
        %475 = vmatpush1.xpose.msra.mxu0 0.0
        %476 = vmatprep.subr.mxu0 0.0
        %477 = vmatpush1.xpose.msra.mxu0 0.0
        %478 = vmatprep.subr.mxu0 0.0
        %479 = vmatpush1.xpose.msra.mxu0 0.0
        %480 = vmatprep.subr.mxu0 0.0
        %481 = vmatpush1.xpose.msra.mxu0 0.0
        %482 = vmatprep.subr.mxu0 0.0
        %483 = vmatpush1.xpose.msra.mxu0 0.0
        %484 = vmatprep.subr.mxu0 0.0
        %485 = vmatpush1.xpose.msra.mxu0 0.0
        %486 = vmatprep.subr.mxu0 0.0
        %487 = vmatpush1.xpose.msra.mxu0 0.0
        %488 = vmatprep.subr.mxu0 0.0
        %489 = vmatpush1.xpose.msra.mxu0 0.0
        %490 = vmatprep.subr.mxu0 %v338
        %491 = vmatpush1.xpose.msra.mxu0 %v336
        %492 = vmatprep.subr.mxu0 0.0
        %493 = vmatpush2.xpose.msra.mxu0 0.0
        %494 = vmatprep.subr.mxu0 0.0
        %495 = vmatpush2.xpose.msra.mxu0 0.0
        %496 = vmatprep.subr.mxu0 0.0
        %497 = vmatpush2.xpose.msra.mxu0 0.0
        %498 = vmatprep.subr.mxu0 0.0
        %499 = vmatpush2.xpose.msra.mxu0 0.0
        %500 = vmatprep.subr.mxu0 0.0
        %501 = vmatpush2.xpose.msra.mxu0 0.0
        %502 = vmatprep.subr.mxu0 0.0
        %503 = vmatpush2.xpose.msra.mxu0 0.0
        %504 = vmatprep.subr.mxu0 0.0
        %505 = vmatpush2.xpose.msra.mxu0 0.0
        %506 = vmatprep.subr.mxu0 0.0
        %507 = vmatpush2.xpose.msra.mxu0 0.0
        %508 = vmatprep.subr.mxu0 0.0
        %509 = vmatpush2.xpose.msra.mxu0 0.0
        %510 = vmatprep.subr.mxu0 0.0
        %511 = vmatpush2.xpose.msra.mxu0 0.0
        %512 = vmatprep.subr.mxu0 0.0
        %513 = vmatpush2.xpose.msra.mxu0 0.0
        %514 = vmatprep.subr.mxu0 0.0
        %515 = vmatpush2.xpose.msra.mxu0 0.0
        %516 = vmatprep.subr.mxu0 0.0
        %517 = vmatpush2.xpose.msra.mxu0 0.0
        %518 = vmatprep.subr.mxu0 0.0
        %519 = vmatpush2.xpose.msra.mxu0 0.0
        %520 = vmatprep.subr.mxu0 0.0
        %521 = vmatpush2.xpose.msra.mxu0 0.0
        %522 = vmatprep.subr.mxu0 0.0
        %523 = vmatpush2.xpose.msra.mxu0 0.0
        %524 = vmatprep.mubr.f32.mxu0 %v456
        %525 = vmatmul.mubr.f32.gmra.mxu0 %v455
        %v526 = vpop.f32.mrf.mxu0
        %v527 = vadd.f32 0.0, %v526
        %v528 = vpop.f32.mrf.mxu0
        %529 = vdwg.mxu0
        %v530 = vadd.f32 %v459, 1e-06
        %v531 = vrcp.pop %v530
        %v532 = vmul.f32 1.0, %v531
        %v533 = vmul.f32 %v527, %v532
        %v534 = vmul.f32 %v533, %v533
        %v535 = vsel %vm260, %v534, 0.0
        %536 = vadd.xlane.f32.xlu0 %v535
        %v537 = vpop.xlane.xlu0 %536
        %v538 = vrsqrt.pop %v537
        %v539 = vmul.f32 %v537, %v538
        %vm540 = vcmp.eq.f32.partialorder %v537, inf
        %v541 = vsel %vm540, %v537, %v539
        %vm542 = vcmp.eq.f32.partialorder %v537, 0.0
        %v543 = vand.u32 %v537, 2147483648
        %v544 = vsel %vm542, %v543, %v541
        %v545 = vadd.f32 %v544, 1e-06
        %v546 = vrcp.pop %v545
        %v547 = vmul.f32 1.0, %v546
        %v548 = vmul.f32 %v533, %v547
        %v550 = vsel %vm260, %v548, 0
        %552 = vmatprep.subr.mxu0 0.0
        %553 = vmatpush1.msra.mxu0 0.0
        %554 = vmatprep.subr.mxu0 0.0
        %555 = vmatpush1.msra.mxu0 0.0
        %556 = vmatprep.subr.mxu0 0.0
        %557 = vmatpush1.msra.mxu0 0.0
        %558 = vmatprep.subr.mxu0 0.0
        %559 = vmatpush1.msra.mxu0 0.0
        %560 = vmatprep.subr.mxu0 0.0
        %561 = vmatpush1.msra.mxu0 0.0
        %562 = vmatprep.subr.mxu0 0.0
        %563 = vmatpush1.msra.mxu0 0.0
        %564 = vmatprep.subr.mxu0 0.0
        %565 = vmatpush1.msra.mxu0 0.0
        %566 = vmatprep.subr.mxu0 0.0
        %567 = vmatpush1.msra.mxu0 0.0
        %568 = vmatprep.subr.mxu0 0.0
        %569 = vmatpush1.msra.mxu0 0.0
        %570 = vmatprep.subr.mxu0 0.0
        %571 = vmatpush1.msra.mxu0 0.0
        %572 = vmatprep.subr.mxu0 0.0
        %573 = vmatpush1.msra.mxu0 0.0
        %574 = vmatprep.subr.mxu0 0.0
        %575 = vmatpush1.msra.mxu0 0.0
        %576 = vmatprep.subr.mxu0 0.0
        %577 = vmatpush1.msra.mxu0 0.0
        %578 = vmatprep.subr.mxu0 0.0
        %579 = vmatpush1.msra.mxu0 0.0
        %580 = vmatprep.subr.mxu0 0.0
        %581 = vmatpush1.msra.mxu0 0.0
        %582 = vmatprep.subr.mxu0 %v348
        %583 = vmatpush1.msra.mxu0 %v345
        %584 = vmatprep.subr.mxu0 0.0
        %585 = vmatpush2.msra.mxu0 0.0
        %586 = vmatprep.subr.mxu0 0.0
        %587 = vmatpush2.msra.mxu0 0.0
        %588 = vmatprep.subr.mxu0 0.0
        %589 = vmatpush2.msra.mxu0 0.0
        %590 = vmatprep.subr.mxu0 0.0
        %591 = vmatpush2.msra.mxu0 0.0
        %592 = vmatprep.subr.mxu0 0.0
        %593 = vmatpush2.msra.mxu0 0.0
        %594 = vmatprep.subr.mxu0 0.0
        %595 = vmatpush2.msra.mxu0 0.0
        %596 = vmatprep.subr.mxu0 0.0
        %597 = vmatpush2.msra.mxu0 0.0
        %598 = vmatprep.subr.mxu0 0.0
        %599 = vmatpush2.msra.mxu0 0.0
        %600 = vmatprep.subr.mxu0 0.0
        %601 = vmatpush2.msra.mxu0 0.0
        %602 = vmatprep.subr.mxu0 0.0
        %603 = vmatpush2.msra.mxu0 0.0
        %604 = vmatprep.subr.mxu0 0.0
        %605 = vmatpush2.msra.mxu0 0.0
        %606 = vmatprep.subr.mxu0 0.0
        %607 = vmatpush2.msra.mxu0 0.0
        %608 = vmatprep.subr.mxu0 0.0
        %609 = vmatpush2.msra.mxu0 0.0
        %610 = vmatprep.subr.mxu0 0.0
        %611 = vmatpush2.msra.mxu0 0.0
        %612 = vmatprep.subr.mxu0 0.0
        %613 = vmatpush2.msra.mxu0 0.0
        %614 = vmatprep.subr.mxu0 0.0
        %615 = vmatpush2.msra.mxu0 0.0
        %616 = vmatprep.mubr.f32.mxu0 0.0
        %617 = vmatmul.mubr.f32.gmra.mxu0 %v550
        %v618 = vpop.f32.mrf.mxu0
        %v619 = vadd.f32 0.0, %v618
        %v620 = vpop.f32.mrf.mxu0
        %v621 = vadd.f32 0.0, %v620
        %622 = vdwg.mxu0
        %v623 = vrot.slane %v619, 4
        %v624 = vmax.f32 %v619, %v623
        %v625 = vrot.slane %v624, 2
        %v626 = vmax.f32 %v624, %v625
        %v627 = vrot.slane %v626, 1
        %v628 = vmax.f32 %v626, %v627
        %v629 = vrot.slane %v621, 4
        %v630 = vmax.f32 %v621, %v629
        %v631 = vrot.slane %v630, 2
        %v632 = vmax.f32 %v630, %v631
        %v633 = vrot.slane %v632, 1
        %v634 = vmax.f32 %v632, %v633
        %v635 = vsub.f32 %v619, %v628
        %v636 = vsub.f32 %v621, %v634
        %v637 = vmul.f32 %v635, 1.442695
        %v638 = vpow.pop %v637
        %v639 = vmul.f32 %v636, 1.442695
        %v640 = vpow.pop %v639
        %v641 = vrot.slane %v638, 4
        %v642 = vadd.f32 %v638, %v641
        %v643 = vrot.slane %v642, 2
        %v644 = vadd.f32 %v642, %v643
        %v645 = vrot.slane %v644, 1
        %v646 = vadd.f32 %v644, %v645
        %v647 = vrot.slane %v640, 4
        %v648 = vadd.f32 %v640, %v647
        %v649 = vrot.slane %v648, 2
        %v650 = vadd.f32 %v648, %v649
        %v651 = vrot.slane %v650, 1
        %v652 = vadd.f32 %v650, %v651
        %v653 = vrcp.pop %v646
        %v654 = vmul.f32 1.0, %v653
        %v655 = vrcp.pop %v652
        %v656 = vmul.f32 1.0, %v655
        %v657 = vmul.f32 %v638, %v654
        %v658 = vmul.f32 %v640, %v656
        %v659 = vadd.f32 %v657, %v658
        %660 = vadd.xlane.f32.xlu0 %v659
        %v661 = vpop.xlane.xlu0 %660
        %662 = vmatprep.subr.mxu0 0.0
        %663 = vmatpush1.xpose.msra.mxu0 0.0
        %664 = vmatprep.subr.mxu0 0.0
        %665 = vmatpush1.xpose.msra.mxu0 0.0
        %666 = vmatprep.subr.mxu0 0.0
        %667 = vmatpush1.xpose.msra.mxu0 0.0
        %668 = vmatprep.subr.mxu0 0.0
        %669 = vmatpush1.xpose.msra.mxu0 0.0
        %670 = vmatprep.subr.mxu0 0.0
        %671 = vmatpush1.xpose.msra.mxu0 0.0
        %672 = vmatprep.subr.mxu0 0.0
        %673 = vmatpush1.xpose.msra.mxu0 0.0
        %674 = vmatprep.subr.mxu0 0.0
        %675 = vmatpush1.xpose.msra.mxu0 0.0
        %676 = vmatprep.subr.mxu0 0.0
        %677 = vmatpush1.xpose.msra.mxu0 0.0
        %678 = vmatprep.subr.mxu0 0.0
        %679 = vmatpush1.xpose.msra.mxu0 0.0
        %680 = vmatprep.subr.mxu0 0.0
        %681 = vmatpush1.xpose.msra.mxu0 0.0
        %682 = vmatprep.subr.mxu0 0.0
        %683 = vmatpush1.xpose.msra.mxu0 0.0
        %684 = vmatprep.subr.mxu0 0.0
        %685 = vmatpush1.xpose.msra.mxu0 0.0
        %686 = vmatprep.subr.mxu0 0.0
        %687 = vmatpush1.xpose.msra.mxu0 0.0
        %688 = vmatprep.subr.mxu0 0.0
        %689 = vmatpush1.xpose.msra.mxu0 0.0
        %690 = vmatprep.subr.mxu0 0.0
        %691 = vmatpush1.xpose.msra.mxu0 0.0
        %692 = vmatprep.subr.mxu0 %v338
        %693 = vmatpush1.xpose.msra.mxu0 %v336
        %694 = vmatprep.subr.mxu0 0.0
        %695 = vmatpush2.xpose.msra.mxu0 0.0
        %696 = vmatprep.subr.mxu0 0.0
        %697 = vmatpush2.xpose.msra.mxu0 0.0
        %698 = vmatprep.subr.mxu0 0.0
        %699 = vmatpush2.xpose.msra.mxu0 0.0
        %700 = vmatprep.subr.mxu0 0.0
        %701 = vmatpush2.xpose.msra.mxu0 0.0
        %702 = vmatprep.subr.mxu0 0.0
        %703 = vmatpush2.xpose.msra.mxu0 0.0
        %704 = vmatprep.subr.mxu0 0.0
        %705 = vmatpush2.xpose.msra.mxu0 0.0
        %706 = vmatprep.subr.mxu0 0.0
        %707 = vmatpush2.xpose.msra.mxu0 0.0
        %708 = vmatprep.subr.mxu0 0.0
        %709 = vmatpush2.xpose.msra.mxu0 0.0
        %710 = vmatprep.subr.mxu0 0.0
        %711 = vmatpush2.xpose.msra.mxu0 0.0
        %712 = vmatprep.subr.mxu0 0.0
        %713 = vmatpush2.xpose.msra.mxu0 0.0
        %714 = vmatprep.subr.mxu0 0.0
        %715 = vmatpush2.xpose.msra.mxu0 0.0
        %716 = vmatprep.subr.mxu0 0.0
        %717 = vmatpush2.xpose.msra.mxu0 0.0
        %718 = vmatprep.subr.mxu0 0.0
        %719 = vmatpush2.xpose.msra.mxu0 0.0
        %720 = vmatprep.subr.mxu0 0.0
        %721 = vmatpush2.xpose.msra.mxu0 0.0
        %722 = vmatprep.subr.mxu0 0.0
        %723 = vmatpush2.xpose.msra.mxu0 0.0
        %724 = vmatprep.subr.mxu0 0.0
        %725 = vmatpush2.xpose.msra.mxu0 0.0
        %726 = vmatprep.mubr.f32.mxu0 %v658
        %727 = vmatmul.mubr.f32.gmra.mxu0 %v657
        %v728 = vpop.f32.mrf.mxu0
        %v729 = vadd.f32 0.0, %v728
        %v730 = vpop.f32.mrf.mxu0
        %731 = vdwg.mxu0
        %v732 = vadd.f32 %v661, 1e-06
        %v733 = vrcp.pop %v732
        %v734 = vmul.f32 1.0, %v733
        %v735 = vmul.f32 %v729, %v734
        %v736 = vmul.f32 %v735, %v735
        %v737 = vsel %vm260, %v736, 0.0
        %738 = vadd.xlane.f32.xlu0 %v737
        %v739 = vpop.xlane.xlu0 %738
        %v740 = vrsqrt.pop %v739
        %v741 = vmul.f32 %v739, %v740
        %vm742 = vcmp.eq.f32.partialorder %v739, inf
        %v743 = vsel %vm742, %v739, %v741
        %vm744 = vcmp.eq.f32.partialorder %v739, 0.0
        %v745 = vand.u32 %v739, 2147483648
        %v746 = vsel %vm744, %v745, %v743
        %v747 = vadd.f32 %v746, 1e-06
        %v748 = vrcp.pop %v747
        %v749 = vmul.f32 1.0, %v748
        %v750 = vmul.f32 %v735, %v749
        %v752 = vsel %vm260, %v750, 0
        %754 = vmatprep.subr.mxu0 0.0
        %755 = vmatpush1.msra.mxu0 0.0
        %756 = vmatprep.subr.mxu0 0.0
        %757 = vmatpush1.msra.mxu0 0.0
        %758 = vmatprep.subr.mxu0 0.0
        %759 = vmatpush1.msra.mxu0 0.0
        %760 = vmatprep.subr.mxu0 0.0
        %761 = vmatpush1.msra.mxu0 0.0
        %762 = vmatprep.subr.mxu0 0.0
        %763 = vmatpush1.msra.mxu0 0.0
        %764 = vmatprep.subr.mxu0 0.0
        %765 = vmatpush1.msra.mxu0 0.0
        %766 = vmatprep.subr.mxu0 0.0
        %767 = vmatpush1.msra.mxu0 0.0
        %768 = vmatprep.subr.mxu0 0.0
        %769 = vmatpush1.msra.mxu0 0.0
        %770 = vmatprep.subr.mxu0 0.0
        %771 = vmatpush1.msra.mxu0 0.0
        %772 = vmatprep.subr.mxu0 0.0
        %773 = vmatpush1.msra.mxu0 0.0
        %774 = vmatprep.subr.mxu0 0.0
        %775 = vmatpush1.msra.mxu0 0.0
        %776 = vmatprep.subr.mxu0 0.0
        %777 = vmatpush1.msra.mxu0 0.0
        %778 = vmatprep.subr.mxu0 0.0
        %779 = vmatpush1.msra.mxu0 0.0
        %780 = vmatprep.subr.mxu0 0.0
        %781 = vmatpush1.msra.mxu0 0.0
        %782 = vmatprep.subr.mxu0 0.0
        %783 = vmatpush1.msra.mxu0 0.0
        %784 = vmatprep.subr.mxu0 %v348
        %785 = vmatpush1.msra.mxu0 %v345
        %786 = vmatprep.subr.mxu0 0.0
        %787 = vmatpush2.msra.mxu0 0.0
        %788 = vmatprep.subr.mxu0 0.0
        %789 = vmatpush2.msra.mxu0 0.0
        %790 = vmatprep.subr.mxu0 0.0
        %791 = vmatpush2.msra.mxu0 0.0
        %792 = vmatprep.subr.mxu0 0.0
        %793 = vmatpush2.msra.mxu0 0.0
        %794 = vmatprep.subr.mxu0 0.0
        %795 = vmatpush2.msra.mxu0 0.0
        %796 = vmatprep.subr.mxu0 0.0
        %797 = vmatpush2.msra.mxu0 0.0
        %798 = vmatprep.subr.mxu0 0.0
        %799 = vmatpush2.msra.mxu0 0.0
        %800 = vmatprep.subr.mxu0 0.0
        %801 = vmatpush2.msra.mxu0 0.0
        %802 = vmatprep.subr.mxu0 0.0
        %803 = vmatpush2.msra.mxu0 0.0
        %804 = vmatprep.subr.mxu0 0.0
        %805 = vmatpush2.msra.mxu0 0.0
        %806 = vmatprep.subr.mxu0 0.0
        %807 = vmatpush2.msra.mxu0 0.0
        %808 = vmatprep.subr.mxu0 0.0
        %809 = vmatpush2.msra.mxu0 0.0
        %810 = vmatprep.subr.mxu0 0.0
        %811 = vmatpush2.msra.mxu0 0.0
        %812 = vmatprep.subr.mxu0 0.0
        %813 = vmatpush2.msra.mxu0 0.0
        %814 = vmatprep.subr.mxu0 0.0
        %815 = vmatpush2.msra.mxu0 0.0
        %816 = vmatprep.subr.mxu0 0.0
        %817 = vmatpush2.msra.mxu0 0.0
        %818 = vmatprep.mubr.f32.mxu0 0.0
        %819 = vmatmul.mubr.f32.gmra.mxu0 %v752
        %v820 = vpop.f32.mrf.mxu0
        %v821 = vadd.f32 0.0, %v820
        %v822 = vpop.f32.mrf.mxu0
        %v823 = vadd.f32 0.0, %v822
        %824 = vdwg.mxu0
        %v825 = vrot.slane %v821, 4
        %v826 = vmax.f32 %v821, %v825
        %v827 = vrot.slane %v826, 2
        %v828 = vmax.f32 %v826, %v827
        %v829 = vrot.slane %v828, 1
        %v830 = vmax.f32 %v828, %v829
        %v831 = vrot.slane %v823, 4
        %v832 = vmax.f32 %v823, %v831
        %v833 = vrot.slane %v832, 2
        %v834 = vmax.f32 %v832, %v833
        %v835 = vrot.slane %v834, 1
        %v836 = vmax.f32 %v834, %v835
        %v837 = vsub.f32 %v821, %v830
        %v838 = vsub.f32 %v823, %v836
        %v839 = vmul.f32 %v837, 1.442695
        %v840 = vpow.pop %v839
        %v841 = vmul.f32 %v838, 1.442695
        %v842 = vpow.pop %v841
        %v843 = vrot.slane %v840, 4
        %v844 = vadd.f32 %v840, %v843
        %v845 = vrot.slane %v844, 2
        %v846 = vadd.f32 %v844, %v845
        %v847 = vrot.slane %v846, 1
        %v848 = vadd.f32 %v846, %v847
        %v849 = vrot.slane %v842, 4
        %v850 = vadd.f32 %v842, %v849
        %v851 = vrot.slane %v850, 2
        %v852 = vadd.f32 %v850, %v851
        %v853 = vrot.slane %v852, 1
        %v854 = vadd.f32 %v852, %v853
        %v855 = vrcp.pop %v848
        %v856 = vmul.f32 1.0, %v855
        %v857 = vrcp.pop %v854
        %v858 = vmul.f32 1.0, %v857
        %v859 = vmul.f32 %v840, %v856
        %v860 = vmul.f32 %v842, %v858
        %v861 = vadd.f32 %v859, %v860
        %862 = vadd.xlane.f32.xlu0 %v861
        %v863 = vpop.xlane.xlu0 %862
        %864 = vmatprep.subr.mxu0 0.0
        %865 = vmatpush1.xpose.msra.mxu0 0.0
        %866 = vmatprep.subr.mxu0 0.0
        %867 = vmatpush1.xpose.msra.mxu0 0.0
        %868 = vmatprep.subr.mxu0 0.0
        %869 = vmatpush1.xpose.msra.mxu0 0.0
        %870 = vmatprep.subr.mxu0 0.0
        %871 = vmatpush1.xpose.msra.mxu0 0.0
        %872 = vmatprep.subr.mxu0 0.0
        %873 = vmatpush1.xpose.msra.mxu0 0.0
        %874 = vmatprep.subr.mxu0 0.0
        %875 = vmatpush1.xpose.msra.mxu0 0.0
        %876 = vmatprep.subr.mxu0 0.0
        %877 = vmatpush1.xpose.msra.mxu0 0.0
        %878 = vmatprep.subr.mxu0 0.0
        %879 = vmatpush1.xpose.msra.mxu0 0.0
        %880 = vmatprep.subr.mxu0 0.0
        %881 = vmatpush1.xpose.msra.mxu0 0.0
        %882 = vmatprep.subr.mxu0 0.0
        %883 = vmatpush1.xpose.msra.mxu0 0.0
        %884 = vmatprep.subr.mxu0 0.0
        %885 = vmatpush1.xpose.msra.mxu0 0.0
        %886 = vmatprep.subr.mxu0 0.0
        %887 = vmatpush1.xpose.msra.mxu0 0.0
        %888 = vmatprep.subr.mxu0 0.0
        %889 = vmatpush1.xpose.msra.mxu0 0.0
        %890 = vmatprep.subr.mxu0 0.0
        %891 = vmatpush1.xpose.msra.mxu0 0.0
        %892 = vmatprep.subr.mxu0 0.0
        %893 = vmatpush1.xpose.msra.mxu0 0.0
        %894 = vmatprep.subr.mxu0 %v338
        %895 = vmatpush1.xpose.msra.mxu0 %v336
        %896 = vmatprep.subr.mxu0 0.0
        %897 = vmatpush2.xpose.msra.mxu0 0.0
        %898 = vmatprep.subr.mxu0 0.0
        %899 = vmatpush2.xpose.msra.mxu0 0.0
        %900 = vmatprep.subr.mxu0 0.0
        %901 = vmatpush2.xpose.msra.mxu0 0.0
        %902 = vmatprep.subr.mxu0 0.0
        %903 = vmatpush2.xpose.msra.mxu0 0.0
        %904 = vmatprep.subr.mxu0 0.0
        %905 = vmatpush2.xpose.msra.mxu0 0.0
        %906 = vmatprep.subr.mxu0 0.0
        %907 = vmatpush2.xpose.msra.mxu0 0.0
        %908 = vmatprep.subr.mxu0 0.0
        %909 = vmatpush2.xpose.msra.mxu0 0.0
        %910 = vmatprep.subr.mxu0 0.0
        %911 = vmatpush2.xpose.msra.mxu0 0.0
        %912 = vmatprep.subr.mxu0 0.0
        %913 = vmatpush2.xpose.msra.mxu0 0.0
        %914 = vmatprep.subr.mxu0 0.0
        %915 = vmatpush2.xpose.msra.mxu0 0.0
        %916 = vmatprep.subr.mxu0 0.0
        %917 = vmatpush2.xpose.msra.mxu0 0.0
        %918 = vmatprep.subr.mxu0 0.0
        %919 = vmatpush2.xpose.msra.mxu0 0.0
        %920 = vmatprep.subr.mxu0 0.0
        %921 = vmatpush2.xpose.msra.mxu0 0.0
        %922 = vmatprep.subr.mxu0 0.0
        %923 = vmatpush2.xpose.msra.mxu0 0.0
        %924 = vmatprep.subr.mxu0 0.0
        %925 = vmatpush2.xpose.msra.mxu0 0.0
        %926 = vmatprep.subr.mxu0 0.0
        %927 = vmatpush2.xpose.msra.mxu0 0.0
        %928 = vmatprep.mubr.f32.mxu0 %v860
        %929 = vmatmul.mubr.f32.gmra.mxu0 %v859
        %v930 = vpop.f32.mrf.mxu0
        %v931 = vadd.f32 0.0, %v930
        %v932 = vpop.f32.mrf.mxu0
        %933 = vdwg.mxu0
        %v934 = vadd.f32 %v863, 1e-06
        %v935 = vrcp.pop %v934
        %v936 = vmul.f32 1.0, %v935
        %v937 = vmul.f32 %v931, %v936
        %v938 = vmul.f32 %v937, %v937
        %v939 = vsel %vm260, %v938, 0.0
        %940 = vadd.xlane.f32.xlu0 %v939
        %v941 = vpop.xlane.xlu0 %940
        %v942 = vrsqrt.pop %v941
        %v943 = vmul.f32 %v941, %v942
        %vm944 = vcmp.eq.f32.partialorder %v941, inf
        %v945 = vsel %vm944, %v941, %v943
        %vm946 = vcmp.eq.f32.partialorder %v941, 0.0
        %v947 = vand.u32 %v941, 2147483648
        %v948 = vsel %vm946, %v947, %v945
        %v949 = vadd.f32 %v948, 1e-06
        %v950 = vrcp.pop %v949
        %v951 = vmul.f32 1.0, %v950
        %v952 = vmul.f32 %v937, %v951
        %953 = vxpose.xlu0.b32.start [1/16] %v952, 128
        %954 = vxpose.xlu0.b32.cont [2/16] 0.0, 128
        %955 = vxpose.xlu0.b32.cont [3/16] 0.0, 128
        %956 = vxpose.xlu0.b32.cont [4/16] 0.0, 128
        %957 = vxpose.xlu0.b32.cont [5/16] 0.0, 128
        %958 = vxpose.xlu0.b32.cont [6/16] 0.0, 128
        %959 = vxpose.xlu0.b32.cont [7/16] 0.0, 128
        %960 = vxpose.xlu0.b32.cont [8/16] 0.0, 128
        %961 = vxpose.xlu0.b32.cont [9/16] 0.0, 128
        %962 = vxpose.xlu0.b32.cont [10/16] 0.0, 128
        %963 = vxpose.xlu0.b32.cont [11/16] 0.0, 128
        %964 = vxpose.xlu0.b32.cont [12/16] 0.0, 128
        %965 = vxpose.xlu0.b32.cont [13/16] 0.0, 128
        %966 = vxpose.xlu0.b32.cont [14/16] 0.0, 128
        %967 = vxpose.xlu0.b32.cont [15/16] 0.0, 128
        %968 = vxpose.xlu0.b32.end [16/16] 0.0, 128
        %v969 = vpop.trf.xlu0
        %v970 = vpop.trf.xlu0
        %v971 = vpop.trf.xlu0
        %v972 = vpop.trf.xlu0
        %v973 = vpop.trf.xlu0
        %v974 = vpop.trf.xlu0
        %v975 = vpop.trf.xlu0
        %v976 = vpop.trf.xlu0
        %v977 = vpop.trf.xlu0
        %v978 = vpop.trf.xlu0
        %v979 = vpop.trf.xlu0
        %v980 = vpop.trf.xlu0
        %v981 = vpop.trf.xlu0
        %v982 = vpop.trf.xlu0
        %v983 = vpop.trf.xlu0
        %v984 = vpop.trf.xlu0
        %vm985 = vcmask 64512
        %v987 = vsel %vm985, %v969, 0
        %989 = vmatprep.subr.mxu0 0.0
        %990 = vmatpush1.msra.mxu0 0.0
        %991 = vmatprep.subr.mxu0 0.0
        %992 = vmatpush1.msra.mxu0 0.0
        %993 = vmatprep.subr.mxu0 0.0
        %994 = vmatpush1.msra.mxu0 0.0
        %995 = vmatprep.subr.mxu0 0.0
        %996 = vmatpush1.msra.mxu0 0.0
        %997 = vmatprep.subr.mxu0 0.0
        %998 = vmatpush1.msra.mxu0 0.0
        %999 = vmatprep.subr.mxu0 0.0
        %1000 = vmatpush1.msra.mxu0 0.0
        %1001 = vmatprep.subr.mxu0 0.0
        %1002 = vmatpush1.msra.mxu0 0.0
        %1003 = vmatprep.subr.mxu0 0.0
        %1004 = vmatpush1.msra.mxu0 0.0
        %1005 = vmatprep.subr.mxu0 0.0
        %1006 = vmatpush1.msra.mxu0 0.0
        %1007 = vmatprep.subr.mxu0 0.0
        %1008 = vmatpush1.msra.mxu0 0.0
        %1009 = vmatprep.subr.mxu0 0.0
        %1010 = vmatpush1.msra.mxu0 0.0
        %1011 = vmatprep.subr.mxu0 0.0
        %1012 = vmatpush1.msra.mxu0 0.0
        %1013 = vmatprep.subr.mxu0 0.0
        %1014 = vmatpush1.msra.mxu0 0.0
        %1015 = vmatprep.subr.mxu0 0.0
        %1016 = vmatpush1.msra.mxu0 0.0
        %1017 = vmatprep.subr.mxu0 0.0
        %1018 = vmatpush1.msra.mxu0 0.0
        %1019 = vmatprep.subr.mxu0 %v860
        %1020 = vmatpush1.msra.mxu0 %v859
        %1021 = vmatprep.subr.mxu0 0.0
        %1022 = vmatpush2.msra.mxu0 0.0
        %1023 = vmatprep.subr.mxu0 0.0
        %1024 = vmatpush2.msra.mxu0 0.0
        %1025 = vmatprep.subr.mxu0 0.0
        %1026 = vmatpush2.msra.mxu0 0.0
        %1027 = vmatprep.subr.mxu0 0.0
        %1028 = vmatpush2.msra.mxu0 0.0
        %1029 = vmatprep.subr.mxu0 0.0
        %1030 = vmatpush2.msra.mxu0 0.0
        %1031 = vmatprep.subr.mxu0 0.0
        %1032 = vmatpush2.msra.mxu0 0.0
        %1033 = vmatprep.subr.mxu0 0.0
        %1034 = vmatpush2.msra.mxu0 0.0
        %1035 = vmatprep.subr.mxu0 0.0
        %1036 = vmatpush2.msra.mxu0 0.0
        %1037 = vmatprep.subr.mxu0 0.0
        %1038 = vmatpush2.msra.mxu0 0.0
        %1039 = vmatprep.subr.mxu0 0.0
        %1040 = vmatpush2.msra.mxu0 0.0
        %1041 = vmatprep.subr.mxu0 0.0
        %1042 = vmatpush2.msra.mxu0 0.0
        %1043 = vmatprep.subr.mxu0 0.0
        %1044 = vmatpush2.msra.mxu0 0.0
        %1045 = vmatprep.subr.mxu0 0.0
        %1046 = vmatpush2.msra.mxu0 0.0
        %1047 = vmatprep.subr.mxu0 0.0
        %1048 = vmatpush2.msra.mxu0 0.0
        %1049 = vmatprep.subr.mxu0 0.0
        %1050 = vmatpush2.msra.mxu0 0.0
        %1051 = vmatprep.subr.mxu0 0.0
        %1052 = vmatpush2.msra.mxu0 0.0
        %1053 = vmatprep.mubr.f32.mxu0 0.0
        %1054 = vmatmul.mubr.f32.gmra.mxu0 %v987
        %v1055 = vpop.f32.mrf.mxu0
        %v1056 = vadd.f32 0.0, %v1055
        %v1057 = vpop.f32.mrf.mxu0
        %v1058 = vadd.f32 0.0, %v1057
        %1059 = vdwg.mxu0
        %v1060 = vmax.f32 %v1056, 0.0
        %v1061 = vmax.f32 %v1058, 0.0
        %v1062 = vld [vmem:[%s4] sm:$0xf]
        %v1063 = vld [vmem:[%s5] sm:$0xf]
        %1065 = vset.pattern.permute.xlu0 0
        %1066 = vperm.xlu0 %1065, %v1063
        %v1067 = vpop.permute.xlu0 %1066
        %v1070 = vsel %vm260, %v1062, 0
        %v1073 = vsel %vm264, %v1060, 0
        %v1076 = vsel %vm264, %v1061, 0
        %1078 = vmatprep.subr.mxu0 0.0
        %1079 = vmatpush1.msra.mxu0 0.0
        %1080 = vmatprep.subr.mxu0 0.0
        %1081 = vmatpush1.msra.mxu0 0.0
        %1082 = vmatprep.subr.mxu0 0.0
        %1083 = vmatpush1.msra.mxu0 0.0
        %1084 = vmatprep.subr.mxu0 0.0
        %1085 = vmatpush1.msra.mxu0 0.0
        %1086 = vmatprep.subr.mxu0 0.0
        %1087 = vmatpush1.msra.mxu0 0.0
        %1088 = vmatprep.subr.mxu0 0.0
        %1089 = vmatpush1.msra.mxu0 0.0
        %1090 = vmatprep.subr.mxu0 0.0
        %1091 = vmatpush1.msra.mxu0 0.0
        %1092 = vmatprep.subr.mxu0 0.0
        %1093 = vmatpush1.msra.mxu0 0.0
        %1094 = vmatprep.subr.mxu0 0.0
        %1095 = vmatpush1.msra.mxu0 0.0
        %1096 = vmatprep.subr.mxu0 0.0
        %1097 = vmatpush1.msra.mxu0 0.0
        %1098 = vmatprep.subr.mxu0 0.0
        %1099 = vmatpush1.msra.mxu0 0.0
        %1100 = vmatprep.subr.mxu0 0.0
        %1101 = vmatpush1.msra.mxu0 0.0
        %1102 = vmatprep.subr.mxu0 0.0
        %1103 = vmatpush1.msra.mxu0 0.0
        %1104 = vmatprep.subr.mxu0 0.0
        %1105 = vmatpush1.msra.mxu0 0.0
        %1106 = vmatprep.subr.mxu0 0.0
        %1107 = vmatpush1.msra.mxu0 0.0
        %1108 = vmatprep.subr.mxu0 %v1076
        %1109 = vmatpush1.msra.mxu0 %v1073
        %1110 = vmatprep.subr.mxu0 0.0
        %1111 = vmatpush2.msra.mxu0 0.0
        %1112 = vmatprep.subr.mxu0 0.0
        %1113 = vmatpush2.msra.mxu0 0.0
        %1114 = vmatprep.subr.mxu0 0.0
        %1115 = vmatpush2.msra.mxu0 0.0
        %1116 = vmatprep.subr.mxu0 0.0
        %1117 = vmatpush2.msra.mxu0 0.0
        %1118 = vmatprep.subr.mxu0 0.0
        %1119 = vmatpush2.msra.mxu0 0.0
        %1120 = vmatprep.subr.mxu0 0.0
        %1121 = vmatpush2.msra.mxu0 0.0
        %1122 = vmatprep.subr.mxu0 0.0
        %1123 = vmatpush2.msra.mxu0 0.0
        %1124 = vmatprep.subr.mxu0 0.0
        %1125 = vmatpush2.msra.mxu0 0.0
        %1126 = vmatprep.subr.mxu0 0.0
        %1127 = vmatpush2.msra.mxu0 0.0
        %1128 = vmatprep.subr.mxu0 0.0
        %1129 = vmatpush2.msra.mxu0 0.0
        %1130 = vmatprep.subr.mxu0 0.0
        %1131 = vmatpush2.msra.mxu0 0.0
        %1132 = vmatprep.subr.mxu0 0.0
        %1133 = vmatpush2.msra.mxu0 0.0
        %1134 = vmatprep.subr.mxu0 0.0
        %1135 = vmatpush2.msra.mxu0 0.0
        %1136 = vmatprep.subr.mxu0 0.0
        %1137 = vmatpush2.msra.mxu0 0.0
        %1138 = vmatprep.subr.mxu0 0.0
        %1139 = vmatpush2.msra.mxu0 0.0
        %1140 = vmatprep.subr.mxu0 0.0
        %1141 = vmatpush2.msra.mxu0 0.0
        %1142 = vmatprep.mubr.f32.mxu0 0.0
        %1143 = vmatmul.mubr.f32.gmra.mxu0 %v1070
        %v1144 = vpop.f32.mrf.mxu0
        %v1145 = vadd.f32 %v1067, %v1144
        %v1146 = vpop.f32.mrf.mxu0
        %v1147 = vadd.f32 %v1067, %v1146
        %1148 = vdwg.mxu0
        %v1150 = vadd.f32 %v1145, %v250
        %v1151 = vadd.f32 %v1147, %v259
        %v1152 = vmax.f32 %v1150, 0.0
        %v1153 = vmax.f32 %v1151, 0.0
        %v1156 = vcombine.low %v1152, %v1153
        %1158 = vst [vmem:[%s244] sm:$0xff] %v1156
        %s1159 = sand.u32 %s159, 1
        %s1160 = scalar_lea.sflag [#allocation3], %s1159
        %s1161 = sand.u32 %s159, 1
        %s1162 = smul.addr %s1161, 8
        %s1163 = scalar_lea.vmem [#allocation2], %s1162
        // Predicated region
        $region45: #{tpu_custom_call.1} parent=43 // pred_check
          %p1164 = pneg %p169
        $region46: #{tpu_custom_call.1} parent=43 // pred_check_branch
          %1166 = sbr.rel (%p1164) target = $region48
        $region47: #{tpu_custom_call.1} parent=43 // pred_region
          %s1168 = ssub.s32 128, 128
          %1169 = vsyncadd %s1160, %s1168
          %s1170 = smul.addr %s20, 2
          %s1171 = smul.addr %s1170, 64
          %s1172 = scalar_lea.hbm %s6, %s1171
          %s1174 = sshll.u32 %s1163, 4
          %s1175 = int_to_ptr.vmem [resolvable:$true] %s1174
          %1177 = dma.vmem_to_hbm [thread:$0]  %s1175, 128, %s1172, %s1160
        $region48: #{tpu_custom_call.1} parent=43 // pred_fallthru
          _
      $region44: #{tpu_custom_call.1} parent=5 // pred_fallthru
        _
      %p1178 = scmp.le.s32.totalorder 2, %s15
      // Predicated region
      $region49: #{tpu_custom_call.1} parent=5 // pred_check
        %p1179 = pneg %p1178
      $region50: #{tpu_custom_call.1} parent=5 // pred_check_branch
        %1181 = sbr.rel (%p1179) target = $region52
      $region51: #{tpu_custom_call.1} parent=5 // pred_region
        %s1182 = ssub.s32 %s15, 2
        // Predicated region
        $region53: #{tpu_custom_call.1} parent=51 // pred_check
          %p1183 = pneg %p175
        $region54: #{tpu_custom_call.1} parent=51 // pred_check_branch
          %1185 = sbr.rel (%p1183) target = $region56
        $region55: #{tpu_custom_call.1} parent=51 // pred_region
          %s1186 = sand.u32 %s160, 1
          %s1187 = scalar_lea.sflag [#allocation3], %s1186
          %s1188 = sand.u32 %s160, 1
          %s1189 = smul.addr %s1188, 8
          %s1190 = scalar_lea.vmem [#allocation2], %s1189
          %1191 = dma.done %s1187, 128
        $region56: #{tpu_custom_call.1} parent=51 // pred_fallthru
          _
      $region52: #{tpu_custom_call.1} parent=5 // pred_fallthru
        _
    $region6: #{tpu_custom_call.1} parent=1 // loop_footer
      %s19 = sadd.s32 1, %s15
    $region7: #{tpu_custom_call.1} parent=1 // loop_footer_branch
      %14 = sbr.rel target = $region3
    $region8: #{tpu_custom_call.1} parent=1 // loop_exit
      _
    %1192 = vsyncpa [#allocation3], 1
    %s1193 = scalar_lea.sflag [#allocation3], 1
    %1194 = vsyncpa %s1193, 1

</llo_original>
